<compile_context>
chip_gen: v7x
topology: tpu7x:2x2x1
jax: 0.10.0
libtpu: 0.0.40
codegen_flags: <defaults>
</compile_context>

<pallas_src>
import functools

import jax
import jax.numpy as jnp
from jax.experimental import pallas as pl
from jax.experimental.pallas import tpu as pltpu


def _round_up(n, m):
    return ((n + m - 1) // m) * m


def qmodel_kernel(x_ref,
                  w1_ref, b1_ref,
                  w2_ref, b2_ref,
                  w3_ref, b3_ref,
                  w4_ref, b4_ref,
                  o_ref):
    bf16 = jnp.bfloat16
    # h1 = relu(x @ W1 + b1)   (bf16 MXU inputs, f32 accumulation)
    h = jnp.dot(x_ref[...].astype(bf16), w1_ref[...],
                preferred_element_type=jnp.float32)
    h = jnp.maximum(h + b1_ref[...], 0.0)
    # h2 = relu(h1 @ W2 + b2)
    h = jnp.dot(h.astype(bf16), w2_ref[...],
                preferred_element_type=jnp.float32)
    h = jnp.maximum(h + b2_ref[...], 0.0)
    # h3 = relu(h2 @ W3 + b3)
    h = jnp.dot(h.astype(bf16), w3_ref[...],
                preferred_element_type=jnp.float32)
    h = jnp.maximum(h + b3_ref[...], 0.0)
    # out = h3 @ W4 + b4       (no activation)
    out = jnp.dot(h.astype(bf16), w4_ref[...],
                  preferred_element_type=jnp.float32)
    o_ref[...] = (out + b4_ref[...]).astype(o_ref.dtype)


def pack_params(params):
    """Pad hidden dims to multiples of 128 lanes and cast weights to bf16.

    Call ONCE whenever the parameters change (NOT per forward call) and pass
    the returned tuple to qmodel_forward.  Zero pad-columns + zero pad-bias +
    ReLU produce exact zeros in pad lanes, and zero pad-rows of the next
    weight kill their contribution, so the math is unchanged.
    """
    w1, b1 = params["w1"], params["b1"]
    w2, b2 = params["w2"], params["b2"]
    w3, b3 = params["w3"], params["b3"]
    w4, b4 = params["w4"], params["b4"]

    h1 = _round_up(w1.shape[1], 128)
    h2 = _round_up(w2.shape[1], 128)
    h3 = _round_up(w3.shape[1], 128)

    def pad_w(w, rows, cols):
        return jnp.pad(w, ((0, rows - w.shape[0]), (0, cols - w.shape[1])))

    def pad_b(b, cols):
        return jnp.pad(b, ((0, 0), (0, cols - b.shape[1])))

    return (
        pad_w(w1, w1.shape[0], h1).astype(jnp.bfloat16), pad_b(b1, h1),
        pad_w(w2, h1, h2).astype(jnp.bfloat16), pad_b(b2, h2),
        pad_w(w3, h2, h3).astype(jnp.bfloat16), pad_b(b3, h3),
        pad_w(w4, h3, w4.shape[1]).astype(jnp.bfloat16), b4,
    )


def qmodel_forward(x, packed, *, block_b=2048, min_grid_steps=2):
    """x: [B, state_dim] f32 (or bf16); packed: output of pack_params().

    Returns [B, action_dim] f32.

    block_b: max batch-tile size (2048-4096 is a good range; per-step VMEM
    footprint at 2048 is only a few MiB).  min_grid_steps=2 keeps both v7x
    TensorCores busy whenever B >= 16.
    """
    B, state_dim = x.shape
    action_dim = packed[-1].shape[1]       # b4: [1, action_dim]

    # Batch tile: multiple of 8 sublanes, capped by block_b, and small enough
    # that the grid has at least `min_grid_steps` steps when B permits.
    tb = max(8, min(_round_up(block_b, 8),
                    _round_up(pl.cdiv(B, min_grid_steps), 8)))
    grid = (pl.cdiv(B, tb),)               # ragged last block handled by Pallas

    # Weights/biases: full-array block, constant index_map -> VMEM-resident,
    # not re-DMA'd per grid step (whole padded weight set is ~75 KB).
    const = lambda a: pl.BlockSpec(a.shape, lambda i: (0,) * a.ndim)

    return pl.pallas_call(
        qmodel_kernel,
        out_shape=jax.ShapeDtypeStruct((B, action_dim), jnp.float32),
        grid_spec=pltpu.PrefetchScalarGridSpec(
            num_scalar_prefetch=0,
            grid=grid,
            in_specs=[pl.BlockSpec((tb, state_dim), lambda i: (i, 0))]
                     + [const(a) for a in packed],
            out_specs=pl.BlockSpec((tb, action_dim), lambda i: (i, 0)),
        ),
        compiler_params=pltpu.CompilerParams(
            dimension_semantics=("parallel",),
            vmem_limit_bytes=32 * 1024 * 1024),
    )(x, *packed)


def init_params(key, state_dim, hidden_dim, action_dim):
    """Deterministic init mimicking nn.Linear's U(-1/sqrt(fan_in), 1/sqrt(fan_in))."""
    dims = [(state_dim, hidden_dim),
            (hidden_dim, hidden_dim),
            (hidden_dim, hidden_dim // 2),
            (hidden_dim // 2, action_dim)]
    params = {}
    for i, (fan_in, fan_out) in enumerate(dims, start=1):
        key, kw, kb = jax.random.split(key, 3)
        bound = 1.0 / (fan_in ** 0.5)
        params[f"w{i}"] = jax.random.uniform(
            kw, (fan_in, fan_out), jnp.float32, -bound, bound)
        params[f"b{i}"] = jax.random.uniform(
            kb, (1, fan_out), jnp.float32, -bound, bound)
    return params


def reference_forward(x, params):
    """Pure-f32 reference (matches the PyTorch module semantics)."""
    h = jnp.maximum(x @ params["w1"] + params["b1"], 0.0)
    h = jnp.maximum(h @ params["w2"] + params["b2"], 0.0)
    h = jnp.maximum(h @ params["w3"] + params["b3"], 0.0)
    return h @ params["w4"] + params["b4"]


def reference_forward_bf16(x, params):
    """Reference matching the kernel's bf16-input / f32-accumulate numerics."""
    bf16 = jnp.bfloat16

    def dense(h, w, b):
        return jnp.dot(h.astype(bf16), w.astype(bf16),
                       preferred_element_type=jnp.float32) + b

    h = jnp.maximum(dense(x, params["w1"], params["b1"]), 0.0)
    h = jnp.maximum(dense(h, params["w2"], params["b2"]), 0.0)
    h = jnp.maximum(dense(h, params["w3"], params["b3"]), 0.0)
    return dense(h, params["w4"], params["b4"])


if __name__ == "__main__":
    state_dim, hidden_dim, action_dim = 32, 32, 8
    batch = 200          # non-multiple of the tile -> exercises ragged last block

    key = jax.random.PRNGKey(0)
    key, kx = jax.random.split(key)
    x = jax.random.normal(kx, (batch, state_dim), jnp.float32)
    params = init_params(key, state_dim, hidden_dim, action_dim)

    # Pack once (outside the per-step forward), then reuse across calls.
    packed = jax.tree_util.tree_map(
        jax.block_until_ready, pack_params(params))

    fwd = jax.jit(functools.partial(qmodel_forward,
                                    block_b=2048, min_grid_steps=2))
    out = jax.block_until_ready(fwd(x, packed))

    ref_bf16 = reference_forward_bf16(x, params)
    ref_f32 = reference_forward(x, params)

    assert out.shape == (batch, action_dim)
    assert jnp.allclose(out, ref_bf16, atol=2e-2, rtol=2e-2), \
        "mismatch vs bf16-matched reference"
    # Looser sanity check against the pure-f32 reference (bf16 weight rounding).
    assert jnp.allclose(out, ref_f32, atol=1e-1, rtol=1e-1), \
        "mismatch vs f32 reference"

    print("KERNEL_OK")
</pallas_src>

<mosaic_0001>
module attributes {stable_mosaic.version = 11 : i64} {
  func.func @qmodel_kernel(%arg0: i32, %arg1: memref<104x32xf32, #tpu.memory_space<vmem>>, %arg2: memref<32x128xbf16, #tpu.memory_space<vmem>>, %arg3: memref<1x128xf32, #tpu.memory_space<vmem>>, %arg4: memref<128x128xbf16, #tpu.memory_space<vmem>>, %arg5: memref<1x128xf32, #tpu.memory_space<vmem>>, %arg6: memref<128x128xbf16, #tpu.memory_space<vmem>>, %arg7: memref<1x128xf32, #tpu.memory_space<vmem>>, %arg8: memref<128x8xbf16, #tpu.memory_space<vmem>>, %arg9: memref<1x8xf32, #tpu.memory_space<vmem>>, %arg10: memref<104x8xf32, #tpu.memory_space<vmem>>) attributes {dimension_semantics = [#tpu.dimension_semantics<parallel>], iteration_bounds = array<i64: 2>, scalar_prefetch = 0 : i64, scratch_operands = 0 : i64, tpu.core_type = #tpu.core_type<tc>, window_params = [{transform_indices = @transform_0, window_bounds = array<i64: 104, 32>}, {pipeline_mode = #tpu.pipeline_mode<synchronous>, transform_indices = @transform_1, window_bounds = array<i64: 32, 128>}, {pipeline_mode = #tpu.pipeline_mode<synchronous>, transform_indices = @transform_2, window_bounds = array<i64: 1, 128>}, {pipeline_mode = #tpu.pipeline_mode<synchronous>, transform_indices = @transform_3, window_bounds = array<i64: 128, 128>}, {pipeline_mode = #tpu.pipeline_mode<synchronous>, transform_indices = @transform_4, window_bounds = array<i64: 1, 128>}, {pipeline_mode = #tpu.pipeline_mode<synchronous>, transform_indices = @transform_5, window_bounds = array<i64: 128, 128>}, {pipeline_mode = #tpu.pipeline_mode<synchronous>, transform_indices = @transform_6, window_bounds = array<i64: 1, 128>}, {pipeline_mode = #tpu.pipeline_mode<synchronous>, transform_indices = @transform_7, window_bounds = array<i64: 128, 8>}, {pipeline_mode = #tpu.pipeline_mode<synchronous>, transform_indices = @transform_8, window_bounds = array<i64: 1, 8>}, {transform_indices = @transform_9, window_bounds = array<i64: 104, 8>}]} {
    %c0 = arith.constant 0 : index
    %c0_0 = arith.constant 0 : index
    %0 = vector.load %arg1[%c0, %c0_0] : memref<104x32xf32, #tpu.memory_space<vmem>>, vector<104x32xf32>
    %1 = arith.truncf %0 : vector<104x32xf32> to vector<104x32xbf16>
    %c0_1 = arith.constant 0 : index
    %c0_2 = arith.constant 0 : index
    %2 = vector.load %arg2[%c0_1, %c0_2] : memref<32x128xbf16, #tpu.memory_space<vmem>>, vector<32x128xbf16>
    %cst = arith.constant dense<0.000000e+00> : vector<104x128xf32>
    %3 = tpu.matmul %1, %2, %cst {dimension_numbers = #tpu.dot_dimension_numbers<[1], [0], [0], [1], [0, 0, 1, 1], [], []>} : vector<104x32xbf16>, vector<32x128xbf16>, vector<104x128xf32> -> vector<104x128xf32>
    %c0_3 = arith.constant 0 : index
    %c0_4 = arith.constant 0 : index
    %4 = vector.load %arg3[%c0_3, %c0_4] : memref<1x128xf32, #tpu.memory_space<vmem>>, vector<1x128xf32>
    %5 = vector.broadcast %4 : vector<1x128xf32> to vector<104x128xf32>
    %6 = arith.addf %3, %5 : vector<104x128xf32>
    %cst_5 = arith.constant 0.000000e+00 : f32
    %7 = vector.broadcast %cst_5 : f32 to vector<104x128xf32>
    %8 = arith.maximumf %6, %7 : vector<104x128xf32>
    %9 = arith.truncf %8 : vector<104x128xf32> to vector<104x128xbf16>
    %c0_6 = arith.constant 0 : index
    %c0_7 = arith.constant 0 : index
    %10 = vector.load %arg4[%c0_6, %c0_7] : memref<128x128xbf16, #tpu.memory_space<vmem>>, vector<128x128xbf16>
    %cst_8 = arith.constant dense<0.000000e+00> : vector<104x128xf32>
    %11 = tpu.matmul %9, %10, %cst_8 {dimension_numbers = #tpu.dot_dimension_numbers<[1], [0], [0], [1], [0, 0, 1, 1], [], []>} : vector<104x128xbf16>, vector<128x128xbf16>, vector<104x128xf32> -> vector<104x128xf32>
    %c0_9 = arith.constant 0 : index
    %c0_10 = arith.constant 0 : index
    %12 = vector.load %arg5[%c0_9, %c0_10] : memref<1x128xf32, #tpu.memory_space<vmem>>, vector<1x128xf32>
    %13 = vector.broadcast %12 : vector<1x128xf32> to vector<104x128xf32>
    %14 = arith.addf %11, %13 : vector<104x128xf32>
    %cst_11 = arith.constant 0.000000e+00 : f32
    %15 = vector.broadcast %cst_11 : f32 to vector<104x128xf32>
    %16 = arith.maximumf %14, %15 : vector<104x128xf32>
    %17 = arith.truncf %16 : vector<104x128xf32> to vector<104x128xbf16>
    %c0_12 = arith.constant 0 : index
    %c0_13 = arith.constant 0 : index
    %18 = vector.load %arg6[%c0_12, %c0_13] : memref<128x128xbf16, #tpu.memory_space<vmem>>, vector<128x128xbf16>
    %cst_14 = arith.constant dense<0.000000e+00> : vector<104x128xf32>
    %19 = tpu.matmul %17, %18, %cst_14 {dimension_numbers = #tpu.dot_dimension_numbers<[1], [0], [0], [1], [0, 0, 1, 1], [], []>} : vector<104x128xbf16>, vector<128x128xbf16>, vector<104x128xf32> -> vector<104x128xf32>
    %c0_15 = arith.constant 0 : index
    %c0_16 = arith.constant 0 : index
    %20 = vector.load %arg7[%c0_15, %c0_16] : memref<1x128xf32, #tpu.memory_space<vmem>>, vector<1x128xf32>
    %21 = vector.broadcast %20 : vector<1x128xf32> to vector<104x128xf32>
    %22 = arith.addf %19, %21 : vector<104x128xf32>
    %cst_17 = arith.constant 0.000000e+00 : f32
    %23 = vector.broadcast %cst_17 : f32 to vector<104x128xf32>
    %24 = arith.maximumf %22, %23 : vector<104x128xf32>
    %25 = arith.truncf %24 : vector<104x128xf32> to vector<104x128xbf16>
    %c0_18 = arith.constant 0 : index
    %c0_19 = arith.constant 0 : index
    %26 = vector.load %arg8[%c0_18, %c0_19] : memref<128x8xbf16, #tpu.memory_space<vmem>>, vector<128x8xbf16>
    %cst_20 = arith.constant dense<0.000000e+00> : vector<104x8xf32>
    %27 = tpu.matmul %25, %26, %cst_20 {dimension_numbers = #tpu.dot_dimension_numbers<[1], [0], [0], [1], [0, 0, 1, 1], [], []>} : vector<104x128xbf16>, vector<128x8xbf16>, vector<104x8xf32> -> vector<104x8xf32>
    %c0_21 = arith.constant 0 : index
    %c0_22 = arith.constant 0 : index
    %28 = vector.load %arg9[%c0_21, %c0_22] : memref<1x8xf32, #tpu.memory_space<vmem>>, vector<1x8xf32>
    %29 = vector.broadcast %28 : vector<1x8xf32> to vector<104x8xf32>
    %30 = arith.addf %27, %29 : vector<104x8xf32>
    %c0_23 = arith.constant 0 : index
    %c0_24 = arith.constant 0 : index
    %31 = vector.load %arg10[%c0_23, %c0_24] : memref<104x8xf32, #tpu.memory_space<vmem>>, vector<104x8xf32>
    tpu.vector_store %arg10[%c0_23, %c0_24], %30 {strides = array<i32>} : memref<104x8xf32, #tpu.memory_space<vmem>>, vector<104x8xf32>,
    return
  }
  func.func @transform_0(%arg0: i32) -> (i32, i32) {
    %c0_i32 = arith.constant 0 : i32
    %c0_i32_0 = arith.constant 0 : i32
    return %arg0, %c0_i32 : i32, i32
  }
  func.func @transform_1(%arg0: i32) -> (i32, i32) {
    %c0_i32 = arith.constant 0 : i32
    %c0_i32_0 = arith.constant 0 : i32
    %c0_i32_1 = arith.constant 0 : i32
    return %c0_i32, %c0_i32_0 : i32, i32
  }
  func.func @transform_2(%arg0: i32) -> (i32, i32) {
    %c0_i32 = arith.constant 0 : i32
    %c0_i32_0 = arith.constant 0 : i32
    %c0_i32_1 = arith.constant 0 : i32
    return %c0_i32, %c0_i32_0 : i32, i32
  }
  func.func @transform_3(%arg0: i32) -> (i32, i32) {
    %c0_i32 = arith.constant 0 : i32
    %c0_i32_0 = arith.constant 0 : i32
    %c0_i32_1 = arith.constant 0 : i32
    return %c0_i32, %c0_i32_0 : i32, i32
  }
  func.func @transform_4(%arg0: i32) -> (i32, i32) {
    %c0_i32 = arith.constant 0 : i32
    %c0_i32_0 = arith.constant 0 : i32
    %c0_i32_1 = arith.constant 0 : i32
    return %c0_i32, %c0_i32_0 : i32, i32
  }
  func.func @transform_5(%arg0: i32) -> (i32, i32) {
    %c0_i32 = arith.constant 0 : i32
    %c0_i32_0 = arith.constant 0 : i32
    %c0_i32_1 = arith.constant 0 : i32
    return %c0_i32, %c0_i32_0 : i32, i32
  }
  func.func @transform_6(%arg0: i32) -> (i32, i32) {
    %c0_i32 = arith.constant 0 : i32
    %c0_i32_0 = arith.constant 0 : i32
    %c0_i32_1 = arith.constant 0 : i32
    return %c0_i32, %c0_i32_0 : i32, i32
  }
  func.func @transform_7(%arg0: i32) -> (i32, i32) {
    %c0_i32 = arith.constant 0 : i32
    %c0_i32_0 = arith.constant 0 : i32
    %c0_i32_1 = arith.constant 0 : i32
    return %c0_i32, %c0_i32_0 : i32, i32
  }
  func.func @transform_8(%arg0: i32) -> (i32, i32) {
    %c0_i32 = arith.constant 0 : i32
    %c0_i32_0 = arith.constant 0 : i32
    %c0_i32_1 = arith.constant 0 : i32
    return %c0_i32, %c0_i32_0 : i32, i32
  }
  func.func @transform_9(%arg0: i32) -> (i32, i32) {
    %c0_i32 = arith.constant 0 : i32
    %c0_i32_0 = arith.constant 0 : i32
    return %arg0, %c0_i32 : i32, i32
  }
}

</mosaic_0001>

<llo_original>
// kernel: qmodel_forward.1
$region0: #{qmodel_forward.1}
  #allocation0 [shape = 'u32[]', space=smem, size = 0x4, offset = 0x4, fixed_abs, tag = 'smem constant byte address 0x4 - core index']
  #allocation1 [shape = 'u32[144,128]{1,0:T(1,128)}', space=vmem, size = 0x12000, scoped, tag = 'internal scratch']
  %s0 = inlined_call_operand.vmem [shape: f32[200,32], index: 0, kind: input, shape index: {}]
  %s1 = inlined_call_operand.vmem [shape: bf16[32,128], index: 1, kind: input, shape index: {}]
  %s2 = inlined_call_operand.vmem [shape: f32[1,128], index: 2, kind: input, shape index: {}]
  %s3 = inlined_call_operand.vmem [shape: bf16[128,128], index: 3, kind: input, shape index: {}]
  %s4 = inlined_call_operand.vmem [shape: f32[1,128], index: 4, kind: input, shape index: {}]
  %s5 = inlined_call_operand.vmem [shape: bf16[128,128], index: 5, kind: input, shape index: {}]
  %s6 = inlined_call_operand.vmem [shape: f32[1,128], index: 6, kind: input, shape index: {}]
  %s7 = inlined_call_operand.vmem [shape: bf16[128,8], index: 7, kind: input, shape index: {}]
  %s8 = inlined_call_operand.vmem [shape: f32[1,8], index: 8, kind: input, shape index: {}]
  %s9 = inlined_call_operand.vmem [shape: f32[200,8], index: 9, kind: output, shape index: {}]
  %s10 = sld [smem:[#allocation0]]
  $region117: #{qmodel_forward.1} parent=0
    _
  %s12 = ssub.s32 1, %s10
  %s13 = scalar_select 0, %s12, %s10
  $region1: #{qmodel_forward.1} parent=0
    #allocation2 [shape = 'u8[106496]{0}', space=vmem, size = 0x1a000, scoped, tag = 'output window, operand 0']
    loop: start=0, step=1, limit=4
    $region2: #{qmodel_forward.1} parent=1 // loop_pre_header
      _
    $region3: #{qmodel_forward.1} parent=1 // loop_header
      %s15 = sphi 0, %s19
      %p16 = scmp.ge.s32.totalorder %s15, 4
      %s25 = sphi 0, %s27
      %s28 = sphi 0, %s25
      %s29 = sphi 0, %s28
      %s45 = sphi 0, %s29
      %s49 = sphi 0, %s49
      %s51 = sphi 0, %s49
      %s52 = sphi 0, %s51
      %s66 = sphi 0, %s52
      %s70 = sphi 0, %s70
      %s72 = sphi 0, %s70
      %s73 = sphi 0, %s72
      %s87 = sphi 0, %s73
      %s91 = sphi 0, %s91
      %s93 = sphi 0, %s91
      %s94 = sphi 0, %s93
      %s108 = sphi 0, %s94
      %s112 = sphi 0, %s112
      %s114 = sphi 0, %s112
      %s115 = sphi 0, %s114
      %s129 = sphi 0, %s115
      %s133 = sphi 0, %s133
      %s135 = sphi 0, %s133
      %s136 = sphi 0, %s135
      %s150 = sphi 0, %s136
      %s154 = sphi 0, %s154
      %s156 = sphi 0, %s154
      %s157 = sphi 0, %s156
      %s171 = sphi 0, %s157
      %s175 = sphi 0, %s175
      %s177 = sphi 0, %s175
      %s178 = sphi 0, %s177
      %s192 = sphi 0, %s178
      %s196 = sphi 0, %s196
      %s198 = sphi 0, %s196
      %s199 = sphi 0, %s198
      %s213 = sphi 0, %s199
      %s219 = sphi 0, %s221
      %s222 = sphi 0, %s219
      %s223 = sphi 0, %s222
      %s239 = sphi 0, %s223
    $region4: #{qmodel_forward.1} parent=1 // loop_header_branch
      %18 = sbr.rel (%p16) target = $region8
    $region5: #{qmodel_forward.1} parent=1 // loop_body
      %s20 = ssub.s32 %s15, 1
      %s21 = ssub.s32 %s15, 2
      %s22 = sadd.s32 %s15, 1
      %s23 = ssub.s32 %s15, %s22
      %p24 = scmp.eq.s32.totalorder %s23, 0
      %s26 = sadd.s32 %s25, 1
      %s27 = scalar_select %p24, %s25, %s26
      %p30 = pneg %p24
      %p31 = scmp.eq.s32.totalorder %s15, 1
      %p32 = por %p30, %p31
      %p33 = scmp.ne.s32.totalorder %s25, %s28
      %p34 = scmp.eq.s32.totalorder %s15, 0
      %p35 = por %p33, %p34
      %p36 = scmp.ne.s32.totalorder %s25, %s28
      %p37 = scmp.eq.s32.totalorder %s20, 1
      %p38 = por %p36, %p37
      %p39 = scmp.ne.s32.totalorder %s28, %s29
      %p40 = scmp.eq.s32.totalorder %s20, 0
      %p41 = por %p39, %p40
      %p42 = scmp.ne.s32.totalorder %s28, %s29
      %p43 = scmp.eq.s32.totalorder %s21, 1
      %p44 = por %p42, %p43
      %p46 = scmp.ne.s32.totalorder %s29, %s45
      %p47 = scmp.eq.s32.totalorder %s21, 0
      %p48 = por %p46, %p47
      %s50 = sadd.s32 %s49, 1
      %p53 = scmp.eq.s32.totalorder %s15, 1
      %p54 = scmp.ne.s32.totalorder %s49, %s51
      %p55 = scmp.eq.s32.totalorder %s15, 0
      %p56 = por %p54, %p55
      %p57 = scmp.ne.s32.totalorder %s49, %s51
      %p58 = scmp.eq.s32.totalorder %s20, 1
      %p59 = por %p57, %p58
      %p60 = scmp.ne.s32.totalorder %s51, %s52
      %p61 = scmp.eq.s32.totalorder %s20, 0
      %p62 = por %p60, %p61
      %p63 = scmp.ne.s32.totalorder %s51, %s52
      %p64 = scmp.eq.s32.totalorder %s21, 1
      %p65 = por %p63, %p64
      %p67 = scmp.ne.s32.totalorder %s52, %s66
      %p68 = scmp.eq.s32.totalorder %s21, 0
      %p69 = por %p67, %p68
      %s71 = sadd.s32 %s70, 1
      %p74 = scmp.eq.s32.totalorder %s15, 1
      %p75 = scmp.ne.s32.totalorder %s70, %s72
      %p76 = scmp.eq.s32.totalorder %s15, 0
      %p77 = por %p75, %p76
      %p78 = scmp.ne.s32.totalorder %s70, %s72
      %p79 = scmp.eq.s32.totalorder %s20, 1
      %p80 = por %p78, %p79
      %p81 = scmp.ne.s32.totalorder %s72, %s73
      %p82 = scmp.eq.s32.totalorder %s20, 0
      %p83 = por %p81, %p82
      %p84 = scmp.ne.s32.totalorder %s72, %s73
      %p85 = scmp.eq.s32.totalorder %s21, 1
      %p86 = por %p84, %p85
      %p88 = scmp.ne.s32.totalorder %s73, %s87
      %p89 = scmp.eq.s32.totalorder %s21, 0
      %p90 = por %p88, %p89
      %s92 = sadd.s32 %s91, 1
      %p95 = scmp.eq.s32.totalorder %s15, 1
      %p96 = scmp.ne.s32.totalorder %s91, %s93
      %p97 = scmp.eq.s32.totalorder %s15, 0
      %p98 = por %p96, %p97
      %p99 = scmp.ne.s32.totalorder %s91, %s93
      %p100 = scmp.eq.s32.totalorder %s20, 1
      %p101 = por %p99, %p100
      %p102 = scmp.ne.s32.totalorder %s93, %s94
      %p103 = scmp.eq.s32.totalorder %s20, 0
      %p104 = por %p102, %p103
      %p105 = scmp.ne.s32.totalorder %s93, %s94
      %p106 = scmp.eq.s32.totalorder %s21, 1
      %p107 = por %p105, %p106
      %p109 = scmp.ne.s32.totalorder %s94, %s108
      %p110 = scmp.eq.s32.totalorder %s21, 0
      %p111 = por %p109, %p110
      %s113 = sadd.s32 %s112, 1
      %p116 = scmp.eq.s32.totalorder %s15, 1
      %p117 = scmp.ne.s32.totalorder %s112, %s114
      %p118 = scmp.eq.s32.totalorder %s15, 0
      %p119 = por %p117, %p118
      %p120 = scmp.ne.s32.totalorder %s112, %s114
      %p121 = scmp.eq.s32.totalorder %s20, 1
      %p122 = por %p120, %p121
      %p123 = scmp.ne.s32.totalorder %s114, %s115
      %p124 = scmp.eq.s32.totalorder %s20, 0
      %p125 = por %p123, %p124
      %p126 = scmp.ne.s32.totalorder %s114, %s115
      %p127 = scmp.eq.s32.totalorder %s21, 1
      %p128 = por %p126, %p127
      %p130 = scmp.ne.s32.totalorder %s115, %s129
      %p131 = scmp.eq.s32.totalorder %s21, 0
      %p132 = por %p130, %p131
      %s134 = sadd.s32 %s133, 1
      %p137 = scmp.eq.s32.totalorder %s15, 1
      %p138 = scmp.ne.s32.totalorder %s133, %s135
      %p139 = scmp.eq.s32.totalorder %s15, 0
      %p140 = por %p138, %p139
      %p141 = scmp.ne.s32.totalorder %s133, %s135
      %p142 = scmp.eq.s32.totalorder %s20, 1
      %p143 = por %p141, %p142
      %p144 = scmp.ne.s32.totalorder %s135, %s136
      %p145 = scmp.eq.s32.totalorder %s20, 0
      %p146 = por %p144, %p145
      %p147 = scmp.ne.s32.totalorder %s135, %s136
      %p148 = scmp.eq.s32.totalorder %s21, 1
      %p149 = por %p147, %p148
      %p151 = scmp.ne.s32.totalorder %s136, %s150
      %p152 = scmp.eq.s32.totalorder %s21, 0
      %p153 = por %p151, %p152
      %s155 = sadd.s32 %s154, 1
      %p158 = scmp.eq.s32.totalorder %s15, 1
      %p159 = scmp.ne.s32.totalorder %s154, %s156
      %p160 = scmp.eq.s32.totalorder %s15, 0
      %p161 = por %p159, %p160
      %p162 = scmp.ne.s32.totalorder %s154, %s156
      %p163 = scmp.eq.s32.totalorder %s20, 1
      %p164 = por %p162, %p163
      %p165 = scmp.ne.s32.totalorder %s156, %s157
      %p166 = scmp.eq.s32.totalorder %s20, 0
      %p167 = por %p165, %p166
      %p168 = scmp.ne.s32.totalorder %s156, %s157
      %p169 = scmp.eq.s32.totalorder %s21, 1
      %p170 = por %p168, %p169
      %p172 = scmp.ne.s32.totalorder %s157, %s171
      %p173 = scmp.eq.s32.totalorder %s21, 0
      %p174 = por %p172, %p173
      %s176 = sadd.s32 %s175, 1
      %p179 = scmp.eq.s32.totalorder %s15, 1
      %p180 = scmp.ne.s32.totalorder %s175, %s177
      %p181 = scmp.eq.s32.totalorder %s15, 0
      %p182 = por %p180, %p181
      %p183 = scmp.ne.s32.totalorder %s175, %s177
      %p184 = scmp.eq.s32.totalorder %s20, 1
      %p185 = por %p183, %p184
      %p186 = scmp.ne.s32.totalorder %s177, %s178
      %p187 = scmp.eq.s32.totalorder %s20, 0
      %p188 = por %p186, %p187
      %p189 = scmp.ne.s32.totalorder %s177, %s178
      %p190 = scmp.eq.s32.totalorder %s21, 1
      %p191 = por %p189, %p190
      %p193 = scmp.ne.s32.totalorder %s178, %s192
      %p194 = scmp.eq.s32.totalorder %s21, 0
      %p195 = por %p193, %p194
      %s197 = sadd.s32 %s196, 1
      %p200 = scmp.eq.s32.totalorder %s15, 1
      %p201 = scmp.ne.s32.totalorder %s196, %s198
      %p202 = scmp.eq.s32.totalorder %s15, 0
      %p203 = por %p201, %p202
      %p204 = scmp.ne.s32.totalorder %s196, %s198
      %p205 = scmp.eq.s32.totalorder %s20, 1
      %p206 = por %p204, %p205
      %p207 = scmp.ne.s32.totalorder %s198, %s199
      %p208 = scmp.eq.s32.totalorder %s20, 0
      %p209 = por %p207, %p208
      %p210 = scmp.ne.s32.totalorder %s198, %s199
      %p211 = scmp.eq.s32.totalorder %s21, 1
      %p212 = por %p210, %p211
      %p214 = scmp.ne.s32.totalorder %s199, %s213
      %p215 = scmp.eq.s32.totalorder %s21, 0
      %p216 = por %p214, %p215
      %s217 = ssub.s32 %s15, %s22
      %p218 = scmp.eq.s32.totalorder %s217, 0
      %s220 = sadd.s32 %s219, 1
      %s221 = scalar_select %p218, %s219, %s220
      %p224 = pneg %p218
      %p225 = scmp.eq.s32.totalorder %s15, 1
      %p226 = por %p224, %p225
      %p227 = scmp.ne.s32.totalorder %s219, %s222
      %p228 = scmp.eq.s32.totalorder %s15, 0
      %p229 = por %p227, %p228
      %p230 = scmp.ne.s32.totalorder %s219, %s222
      %p231 = scmp.eq.s32.totalorder %s20, 1
      %p232 = por %p230, %p231
      %p233 = scmp.ne.s32.totalorder %s222, %s223
      %p234 = scmp.eq.s32.totalorder %s20, 0
      %p235 = por %p233, %p234
      %p236 = scmp.ne.s32.totalorder %s222, %s223
      %p237 = scmp.eq.s32.totalorder %s21, 1
      %p238 = por %p236, %p237
      %p240 = scmp.ne.s32.totalorder %s223, %s239
      %p241 = scmp.eq.s32.totalorder %s21, 0
      %p242 = por %p240, %p241
      %p243 = scmp.le.s32.totalorder 1, %s15
      %p244 = scmp.lt.s32.totalorder %s15, 3
      %p245 = pnand %p243, %p244
      %p246 = pneg %p245
      // Predicated region
      $region9: #{qmodel_forward.1} parent=5 // pred_check
        _
      $region10: #{qmodel_forward.1} parent=5 // pred_check_branch
        %248 = sbr.rel (%p245) target = $region12
      $region11: #{qmodel_forward.1} parent=5 // pred_region
        %s249 = ssub.s32 %s15, 1
        // Predicated region
        $region13: #{qmodel_forward.1} parent=11 // pred_check
          %p250 = pneg %p62
        $region14: #{qmodel_forward.1} parent=11 // pred_check_branch
          %252 = sbr.rel (%p250) target = $region16
        $region15: #{qmodel_forward.1} parent=11 // pred_region
          _
        $region16: #{qmodel_forward.1} parent=11 // pred_fallthru
          _
        // Predicated region
        $region17: #{qmodel_forward.1} parent=11 // pred_check
          %p253 = pneg %p83
        $region18: #{qmodel_forward.1} parent=11 // pred_check_branch
          %255 = sbr.rel (%p253) target = $region20
        $region19: #{qmodel_forward.1} parent=11 // pred_region
          _
        $region20: #{qmodel_forward.1} parent=11 // pred_fallthru
          _
        // Predicated region
        $region21: #{qmodel_forward.1} parent=11 // pred_check
          %p256 = pneg %p104
        $region22: #{qmodel_forward.1} parent=11 // pred_check_branch
          %258 = sbr.rel (%p256) target = $region24
        $region23: #{qmodel_forward.1} parent=11 // pred_region
          _
        $region24: #{qmodel_forward.1} parent=11 // pred_fallthru
          _
        // Predicated region
        $region25: #{qmodel_forward.1} parent=11 // pred_check
          %p259 = pneg %p125
        $region26: #{qmodel_forward.1} parent=11 // pred_check_branch
          %261 = sbr.rel (%p259) target = $region28
        $region27: #{qmodel_forward.1} parent=11 // pred_region
          _
        $region28: #{qmodel_forward.1} parent=11 // pred_fallthru
          _
        // Predicated region
        $region29: #{qmodel_forward.1} parent=11 // pred_check
          %p262 = pneg %p146
        $region30: #{qmodel_forward.1} parent=11 // pred_check_branch
          %264 = sbr.rel (%p262) target = $region32
        $region31: #{qmodel_forward.1} parent=11 // pred_region
          _
        $region32: #{qmodel_forward.1} parent=11 // pred_fallthru
          _
        // Predicated region
        $region33: #{qmodel_forward.1} parent=11 // pred_check
          %p265 = pneg %p167
        $region34: #{qmodel_forward.1} parent=11 // pred_check_branch
          %267 = sbr.rel (%p265) target = $region36
        $region35: #{qmodel_forward.1} parent=11 // pred_region
          _
        $region36: #{qmodel_forward.1} parent=11 // pred_fallthru
          _
        // Predicated region
        $region37: #{qmodel_forward.1} parent=11 // pred_check
          %p268 = pneg %p188
        $region38: #{qmodel_forward.1} parent=11 // pred_check_branch
          %270 = sbr.rel (%p268) target = $region40
        $region39: #{qmodel_forward.1} parent=11 // pred_region
          _
        $region40: #{qmodel_forward.1} parent=11 // pred_fallthru
          _
        // Predicated region
        $region41: #{qmodel_forward.1} parent=11 // pred_check
          %p271 = pneg %p209
        $region42: #{qmodel_forward.1} parent=11 // pred_check_branch
          %273 = sbr.rel (%p271) target = $region44
        $region43: #{qmodel_forward.1} parent=11 // pred_region
          _
        $region44: #{qmodel_forward.1} parent=11 // pred_fallthru
          _
      $region12: #{qmodel_forward.1} parent=5 // pred_fallthru
        _
      %p274 = scmp.lt.s32.totalorder %s15, 2
      // Predicated region
      $region45: #{qmodel_forward.1} parent=5 // pred_check
        %p275 = pneg %p274
      $region46: #{qmodel_forward.1} parent=5 // pred_check_branch
        %277 = sbr.rel (%p275) target = $region48
      $region47: #{qmodel_forward.1} parent=5 // pred_region
        // Predicated region
        $region49: #{qmodel_forward.1} parent=47 // pred_check
          %p278 = pneg %p35
        $region50: #{qmodel_forward.1} parent=47 // pred_check_branch
          %280 = sbr.rel (%p278) target = $region52
        $region51: #{qmodel_forward.1} parent=47 // pred_region
          %s281 = smul.u32 13, %s15
          %s282 = ssub.s32 25, %s281
          %p283 = scmp.lt.s32.totalorder %s282, 13
          %s284 = scalar_select %p283, %s282, 13
          %s285 = smul.u32 128, %s284
          %p286 = scmp.lt.s32.totalorder %s281, 24
          %s287 = scalar_select %p286, %s281, 24
          %s288 = smul.addr %s287, 8
          %s289 = scalar_lea.vmem %s0, %s288
          %s290 = smul.u32 13, %s15
          %s291 = ssub.s32 25, %s290
          %p292 = scmp.lt.s32.totalorder %s291, 13
          %s293 = scalar_select %p292, %s291, 13
          %s294 = smul.u32 128, %s293
        $region52: #{qmodel_forward.1} parent=47 // pred_fallthru
          _
      $region48: #{qmodel_forward.1} parent=5 // pred_fallthru
        _
      %p295 = scmp.le.s32.totalorder 1, %s15
      %p296 = scmp.lt.s32.totalorder %s15, 3
      %p297 = pnand %p295, %p296
      %p298 = pneg %p297
      // Predicated region
      $region53: #{qmodel_forward.1} parent=5 // pred_check
        _
      $region54: #{qmodel_forward.1} parent=5 // pred_check_branch
        %300 = sbr.rel (%p297) target = $region56
      $region55: #{qmodel_forward.1} parent=5 // pred_region
        %s301 = ssub.s32 %s15, 1
        %s302 = smul.u32 13, %s20
        %s303 = ssub.s32 25, %s302
        %p304 = scmp.lt.s32.totalorder %s303, 13
        %s305 = scalar_select %p304, %s303, 13
        %s306 = smul.u32 128, %s305
        %p307 = scmp.lt.s32.totalorder %s302, 24
        %s308 = scalar_select %p307, %s302, 24
        %s309 = smul.addr %s308, 8
        %s310 = scalar_lea.vmem %s0, %s309
        %p311 = pneg %p41
        %p312 = pneg %p38
        %p313 = pneg %p62
        %p314 = pneg %p59
        %p315 = pneg %p83
        %p316 = pneg %p80
        %p317 = pneg %p104
        %p318 = pneg %p101
        %p319 = pneg %p125
        %p320 = pneg %p122
        %p321 = pneg %p146
        %p322 = pneg %p143
        %p323 = pneg %p167
        %p324 = pneg %p164
        %p325 = pneg %p188
        %p326 = pneg %p185
        %p327 = pneg %p209
        %p328 = pneg %p206
        %p329 = pneg %p235
        %p330 = pneg %p232
        %s331 = sand.u32 %s222, 1
        %s332 = sand.u32 %s222, 1
        %s333 = smul.addr %s332, 104
        %s334 = scalar_lea.vmem [#allocation2], %s333
        %s335 = smul.u32 13, %s20
        %s336 = ssub.s32 25, %s335
        %p337 = scmp.lt.s32.totalorder %s336, 13
        %s338 = scalar_select %p337, %s336, 13
        %s339 = smul.u32 128, %s338
        %p340 = scmp.lt.s32.totalorder %s335, 24
        %s341 = scalar_select %p340, %s335, 24
        %s342 = smul.addr %s341, 8
        %s343 = scalar_lea.vmem %s0, %s342
        %s344 = smul.u32 13, %s20
        %s345 = ssub.s32 25, %s344
        %p346 = scmp.lt.s32.totalorder %s345, 13
        %s347 = scalar_select %p346, %s345, 13
        %s348 = smul.u32 128, %s347
        %s349 = smul.u32 13, %s20
        %s350 = ssub.s32 25, %s349
        %p351 = scmp.lt.s32.totalorder %s350, 13
        %s352 = scalar_select %p351, %s350, 13
        %s353 = smul.u32 128, %s352
        %v355 = vld [vmem:[%s343] sm:$0xff]
        %v356 = vld [vmem:[%s343 + $0x8] sm:$0xff]
        %v357 = vld [vmem:[%s343 + $0x10] sm:$0xff]
        %v358 = vld [vmem:[%s343 + $0x18] sm:$0xff]
        %v359 = vld [vmem:[%s343 + $0x20] sm:$0xff]
        %v360 = vld [vmem:[%s343 + $0x28] sm:$0xff]
        %v361 = vld [vmem:[%s343 + $0x30] sm:$0xff]
        %v362 = vld [vmem:[%s343 + $0x38] sm:$0xff]
        %v363 = vld [vmem:[%s343 + $0x40] sm:$0xff]
        %v364 = vld [vmem:[%s343 + $0x48] sm:$0xff]
        %v365 = vld [vmem:[%s343 + $0x50] sm:$0xff]
        %v366 = vld [vmem:[%s343 + $0x58] sm:$0xff]
        %v367 = vld [vmem:[%s343 + $0x60] sm:$0xff]
        %v368 = vpack.c.bf16 %v356, %v355
        %v369 = vpack.c.bf16 %v358, %v357
        %v370 = vpack.c.bf16 %v360, %v359
        %v371 = vpack.c.bf16 %v362, %v361
        %v372 = vpack.c.bf16 %v364, %v363
        %v373 = vpack.c.bf16 %v366, %v365
        %v374 = vpack.c.bf16 %v367, %v367
        %v375 = vld [vmem:[%s1] sm:$0xf]
        %v376 = vld [vmem:[%s1 + $0x4] sm:$0xf]
        %v377 = vld [vmem:[%s1 + $0x8] sm:$0xf]
        %v378 = vld [vmem:[%s1 + $0xc] sm:$0xf]
        %v379 = vld [vmem:[%s2] sm:$0x1]
        %v381 = vlaneseq
        %v382 = vshrl.u32 %v381, 7
        %v383 = vsub.s32 0, %v382
        %v384 = vrot.slane %v379, %v383
        %v390 = vunpack.c.l.b16 %v375
        %v391 = vunpack.c.l.b16 %v376
        %v392 = vunpack.c.l.b16 %v377
        %v393 = vunpack.c.l.b16 %v378
        %v394 = vpack.c.b16 %v391, %v390
        %v395 = vpack.c.b16 %v393, %v392
        %vm398 = vcmask 261120
        %v400 = vsel %vm398, %v368, 0
        %v403 = vsel %vm398, %v369, 0
        %v406 = vsel %vm398, %v370, 0
        %v409 = vsel %vm398, %v371, 0
        %v412 = vsel %vm398, %v372, 0
        %v415 = vsel %vm398, %v373, 0
        %v418 = vsel %vm398, %v374, 0
        %420 = vmatprep.subr.bf16.mxu0 0
        %421 = vmatpush1.bf16.msra.mxu0 %v394
        %422 = vmatprep.subr.bf16.mxu0 0
        %423 = vmatpush1.bf16.msra.mxu0 %v395
        %424 = vmatprep.subr.bf16.mxu0 0
        %425 = vmatpush1.bf16.msra.mxu0 0
        %426 = vmatprep.subr.bf16.mxu0 0
        %427 = vmatpush1.bf16.msra.mxu0 0
        %428 = vmatprep.subr.bf16.mxu0 0
        %429 = vmatpush1.bf16.msra.mxu0 0
        %430 = vmatprep.subr.bf16.mxu0 0
        %431 = vmatpush1.bf16.msra.mxu0 0
        %432 = vmatprep.subr.bf16.mxu0 0
        %433 = vmatpush1.bf16.msra.mxu0 0
        %434 = vmatprep.subr.bf16.mxu0 0
        %435 = vmatpush1.bf16.msra.mxu0 0
        %436 = vmatprep.subr.bf16.mxu0 0
        %437 = vmatpush1.bf16.msra.mxu0 0
        %438 = vmatprep.subr.bf16.mxu0 0
        %439 = vmatpush1.bf16.msra.mxu0 0
        %440 = vmatprep.subr.bf16.mxu0 0
        %441 = vmatpush1.bf16.msra.mxu0 0
        %442 = vmatprep.subr.bf16.mxu0 0
        %443 = vmatpush1.bf16.msra.mxu0 0
        %444 = vmatprep.subr.bf16.mxu0 0
        %445 = vmatpush1.bf16.msra.mxu0 0
        %446 = vmatprep.subr.bf16.mxu0 0
        %447 = vmatpush1.bf16.msra.mxu0 0
        %448 = vmatprep.subr.bf16.mxu0 0
        %449 = vmatpush1.bf16.msra.mxu0 0
        %450 = vmatprep.subr.bf16.mxu0 0
        %451 = vmatpush1.bf16.msra.mxu0 0
        %452 = vmatprep.mubr.bf16.mxu0 0
        %453 = vmatmul.mubr.bf16.gmra.mrb[0].mxu0 %v400
        %v454 = vpop.f32.mrb[0].mxu0
        %v455 = vadd.f32 %v384, %v454
        %v456 = vpop.f32.mrb[0].mxu0
        %v457 = vpop.f32.mrb[0].mxu0
        %v458 = vadd.f32 %v384, %v457
        %v459 = vpop.f32.mrb[0].mxu0
        %460 = vmatprep.mubr.bf16.mxu0 0
        %461 = vmatmul.mubr.bf16.gmra.mrb[0].mxu0 %v403
        %v462 = vpop.f32.mrb[0].mxu0
        %v463 = vadd.f32 %v384, %v462
        %v464 = vpop.f32.mrb[0].mxu0
        %v465 = vpop.f32.mrb[0].mxu0
        %v466 = vadd.f32 %v384, %v465
        %v467 = vpop.f32.mrb[0].mxu0
        %468 = vmatprep.mubr.bf16.mxu0 0
        %469 = vmatmul.mubr.bf16.gmra.mrb[0].mxu0 %v406
        %v470 = vpop.f32.mrb[0].mxu0
        %v471 = vadd.f32 %v384, %v470
        %v472 = vpop.f32.mrb[0].mxu0
        %v473 = vpop.f32.mrb[0].mxu0
        %v474 = vadd.f32 %v384, %v473
        %v475 = vpop.f32.mrb[0].mxu0
        %476 = vmatprep.mubr.bf16.mxu0 0
        %477 = vmatmul.mubr.bf16.gmra.mrb[0].mxu0 %v409
        %v478 = vpop.f32.mrb[0].mxu0
        %v479 = vadd.f32 %v384, %v478
        %v480 = vpop.f32.mrb[0].mxu0
        %v481 = vpop.f32.mrb[0].mxu0
        %v482 = vadd.f32 %v384, %v481
        %v483 = vpop.f32.mrb[0].mxu0
        %484 = vmatprep.mubr.bf16.mxu0 0
        %485 = vmatmul.mubr.bf16.gmra.mrb[0].mxu0 %v412
        %v486 = vpop.f32.mrb[0].mxu0
        %v487 = vadd.f32 %v384, %v486
        %v488 = vpop.f32.mrb[0].mxu0
        %v489 = vpop.f32.mrb[0].mxu0
        %v490 = vadd.f32 %v384, %v489
        %v491 = vpop.f32.mrb[0].mxu0
        %492 = vmatprep.mubr.bf16.mxu0 0
        %493 = vmatmul.mubr.bf16.gmra.mrb[0].mxu0 %v415
        %v494 = vpop.f32.mrb[0].mxu0
        %v495 = vadd.f32 %v384, %v494
        %v496 = vpop.f32.mrb[0].mxu0
        %v497 = vpop.f32.mrb[0].mxu0
        %v498 = vadd.f32 %v384, %v497
        %v499 = vpop.f32.mrb[0].mxu0
        %500 = vmatprep.mubr.bf16.mxu0 0
        %501 = vmatmul.mubr.bf16.gmra.mrb[0].mxu0 %v418
        %v502 = vpop.f32.mrb[0].mxu0
        %v503 = vadd.f32 %v384, %v502
        %v504 = vpop.f32.mrb[0].mxu0
        %v505 = vpop.f32.mrb[0].mxu0
        %v506 = vpop.f32.mrb[0].mxu0
        %507 = vdwg.mxu0
        %v508 = vmax.f32 %v455, 0.0
        %v509 = vmax.f32 %v458, 0.0
        %v510 = vmax.f32 %v463, 0.0
        %v511 = vmax.f32 %v466, 0.0
        %v512 = vmax.f32 %v471, 0.0
        %v513 = vmax.f32 %v474, 0.0
        %v514 = vmax.f32 %v479, 0.0
        %v515 = vmax.f32 %v482, 0.0
        %v516 = vmax.f32 %v487, 0.0
        %v517 = vmax.f32 %v490, 0.0
        %v518 = vmax.f32 %v495, 0.0
        %v519 = vmax.f32 %v498, 0.0
        %v520 = vmax.f32 %v503, 0.0
        %v521 = vpack.c.bf16 %v509, %v508
        %v522 = vpack.c.bf16 %v511, %v510
        %v523 = vpack.c.bf16 %v513, %v512
        %v524 = vpack.c.bf16 %v515, %v514
        %v525 = vpack.c.bf16 %v517, %v516
        %v526 = vpack.c.bf16 %v519, %v518
        %v527 = vpack.c.bf16 %v520, %v520
        %v528 = vld [vmem:[%s3] sm:$0xf]
        %v529 = vld [vmem:[%s3 + $0x4] sm:$0xf]
        %v530 = vld [vmem:[%s3 + $0x8] sm:$0xf]
        %v531 = vld [vmem:[%s3 + $0xc] sm:$0xf]
        %v532 = vld [vmem:[%s3 + $0x10] sm:$0xf]
        %v533 = vld [vmem:[%s3 + $0x14] sm:$0xf]
        %v534 = vld [vmem:[%s3 + $0x18] sm:$0xf]
        %v535 = vld [vmem:[%s3 + $0x1c] sm:$0xf]
        %v536 = vld [vmem:[%s3 + $0x20] sm:$0xf]
        %v537 = vld [vmem:[%s3 + $0x24] sm:$0xf]
        %v538 = vld [vmem:[%s3 + $0x28] sm:$0xf]
        %v539 = vld [vmem:[%s3 + $0x2c] sm:$0xf]
        %v540 = vld [vmem:[%s3 + $0x30] sm:$0xf]
        %v541 = vld [vmem:[%s3 + $0x34] sm:$0xf]
        %v542 = vld [vmem:[%s3 + $0x38] sm:$0xf]
        %v543 = vld [vmem:[%s3 + $0x3c] sm:$0xf]
        %v544 = vld [vmem:[%s4] sm:$0x1]
        %v546 = vlaneseq
        %v547 = vshrl.u32 %v546, 7
        %v548 = vsub.s32 0, %v547
        %v549 = vrot.slane %v544, %v548
        %v567 = vunpack.c.l.b16 %v528
        %v568 = vunpack.c.l.b16 %v529
        %v569 = vunpack.c.l.b16 %v530
        %v570 = vunpack.c.l.b16 %v531
        %v571 = vunpack.c.l.b16 %v532
        %v572 = vunpack.c.l.b16 %v533
        %v573 = vunpack.c.l.b16 %v534
        %v574 = vunpack.c.l.b16 %v535
        %v575 = vunpack.c.l.b16 %v536
        %v576 = vunpack.c.l.b16 %v537
        %v577 = vunpack.c.l.b16 %v538
        %v578 = vunpack.c.l.b16 %v539
        %v579 = vunpack.c.l.b16 %v540
        %v580 = vunpack.c.l.b16 %v541
        %v581 = vunpack.c.l.b16 %v542
        %v582 = vunpack.c.l.b16 %v543
        %v583 = vpack.c.b16 %v568, %v567
        %v584 = vpack.c.b16 %v570, %v569
        %v585 = vpack.c.b16 %v572, %v571
        %v586 = vpack.c.b16 %v574, %v573
        %v587 = vpack.c.b16 %v576, %v575
        %v588 = vpack.c.b16 %v578, %v577
        %v589 = vpack.c.b16 %v580, %v579
        %v590 = vpack.c.b16 %v582, %v581
        %599 = vmatprep.subr.bf16.mxu0 0
        %600 = vmatpush1.bf16.msra.mxu0 %v583
        %601 = vmatprep.subr.bf16.mxu0 0
        %602 = vmatpush1.bf16.msra.mxu0 %v584
        %603 = vmatprep.subr.bf16.mxu0 0
        %604 = vmatpush1.bf16.msra.mxu0 %v585
        %605 = vmatprep.subr.bf16.mxu0 0
        %606 = vmatpush1.bf16.msra.mxu0 %v586
        %607 = vmatprep.subr.bf16.mxu0 0
        %608 = vmatpush1.bf16.msra.mxu0 %v587
        %609 = vmatprep.subr.bf16.mxu0 0
        %610 = vmatpush1.bf16.msra.mxu0 %v588
        %611 = vmatprep.subr.bf16.mxu0 0
        %612 = vmatpush1.bf16.msra.mxu0 %v589
        %613 = vmatprep.subr.bf16.mxu0 0
        %614 = vmatpush1.bf16.msra.mxu0 %v590
        %615 = vmatprep.subr.bf16.mxu0 0
        %616 = vmatpush1.bf16.msra.mxu0 0
        %617 = vmatprep.subr.bf16.mxu0 0
        %618 = vmatpush1.bf16.msra.mxu0 0
        %619 = vmatprep.subr.bf16.mxu0 0
        %620 = vmatpush1.bf16.msra.mxu0 0
        %621 = vmatprep.subr.bf16.mxu0 0
        %622 = vmatpush1.bf16.msra.mxu0 0
        %623 = vmatprep.subr.bf16.mxu0 0
        %624 = vmatpush1.bf16.msra.mxu0 0
        %625 = vmatprep.subr.bf16.mxu0 0
        %626 = vmatpush1.bf16.msra.mxu0 0
        %627 = vmatprep.subr.bf16.mxu0 0
        %628 = vmatpush1.bf16.msra.mxu0 0
        %629 = vmatprep.subr.bf16.mxu0 0
        %630 = vmatpush1.bf16.msra.mxu0 0
        %631 = vmatprep.mubr.bf16.mxu0 0
        %632 = vmatmul.mubr.bf16.gmra.mrb[0].mxu0 %v521
        %v633 = vpop.f32.mrb[0].mxu0
        %v634 = vadd.f32 %v549, %v633
        %v635 = vpop.f32.mrb[0].mxu0
        %v636 = vpop.f32.mrb[0].mxu0
        %v637 = vadd.f32 %v549, %v636
        %v638 = vpop.f32.mrb[0].mxu0
        %639 = vmatprep.mubr.bf16.mxu0 0
        %640 = vmatmul.mubr.bf16.gmra.mrb[0].mxu0 %v522
        %v641 = vpop.f32.mrb[0].mxu0
        %v642 = vadd.f32 %v549, %v641
        %v643 = vpop.f32.mrb[0].mxu0
        %v644 = vpop.f32.mrb[0].mxu0
        %v645 = vadd.f32 %v549, %v644
        %v646 = vpop.f32.mrb[0].mxu0
        %647 = vmatprep.mubr.bf16.mxu0 0
        %648 = vmatmul.mubr.bf16.gmra.mrb[0].mxu0 %v523
        %v649 = vpop.f32.mrb[0].mxu0
        %v650 = vadd.f32 %v549, %v649
        %v651 = vpop.f32.mrb[0].mxu0
        %v652 = vpop.f32.mrb[0].mxu0
        %v653 = vadd.f32 %v549, %v652
        %v654 = vpop.f32.mrb[0].mxu0
        %655 = vmatprep.mubr.bf16.mxu0 0
        %656 = vmatmul.mubr.bf16.gmra.mrb[0].mxu0 %v524
        %v657 = vpop.f32.mrb[0].mxu0
        %v658 = vadd.f32 %v549, %v657
        %v659 = vpop.f32.mrb[0].mxu0
        %v660 = vpop.f32.mrb[0].mxu0
        %v661 = vadd.f32 %v549, %v660
        %v662 = vpop.f32.mrb[0].mxu0
        %663 = vmatprep.mubr.bf16.mxu0 0
        %664 = vmatmul.mubr.bf16.gmra.mrb[0].mxu0 %v525
        %v665 = vpop.f32.mrb[0].mxu0
        %v666 = vadd.f32 %v549, %v665
        %v667 = vpop.f32.mrb[0].mxu0
        %v668 = vpop.f32.mrb[0].mxu0
        %v669 = vadd.f32 %v549, %v668
        %v670 = vpop.f32.mrb[0].mxu0
        %671 = vmatprep.mubr.bf16.mxu0 0
        %672 = vmatmul.mubr.bf16.gmra.mrb[0].mxu0 %v526
        %v673 = vpop.f32.mrb[0].mxu0
        %v674 = vadd.f32 %v549, %v673
        %v675 = vpop.f32.mrb[0].mxu0
        %v676 = vpop.f32.mrb[0].mxu0
        %v677 = vadd.f32 %v549, %v676
        %v678 = vpop.f32.mrb[0].mxu0
        %679 = vmatprep.mubr.bf16.mxu0 0
        %680 = vmatmul.mubr.bf16.gmra.mrb[0].mxu0 %v527
        %v681 = vpop.f32.mrb[0].mxu0
        %v682 = vadd.f32 %v549, %v681
        %v683 = vpop.f32.mrb[0].mxu0
        %v684 = vpop.f32.mrb[0].mxu0
        %v685 = vpop.f32.mrb[0].mxu0
        %686 = vdwg.mxu0
        %v687 = vmax.f32 %v634, 0.0
        %v688 = vmax.f32 %v637, 0.0
        %v689 = vmax.f32 %v642, 0.0
        %v690 = vmax.f32 %v645, 0.0
        %v691 = vmax.f32 %v650, 0.0
        %v692 = vmax.f32 %v653, 0.0
        %v693 = vmax.f32 %v658, 0.0
        %v694 = vmax.f32 %v661, 0.0
        %v695 = vmax.f32 %v666, 0.0
        %v696 = vmax.f32 %v669, 0.0
        %v697 = vmax.f32 %v674, 0.0
        %v698 = vmax.f32 %v677, 0.0
        %v699 = vmax.f32 %v682, 0.0
        %v700 = vpack.c.bf16 %v688, %v687
        %v701 = vpack.c.bf16 %v690, %v689
        %v702 = vpack.c.bf16 %v692, %v691
        %v703 = vpack.c.bf16 %v694, %v693
        %v704 = vpack.c.bf16 %v696, %v695
        %v705 = vpack.c.bf16 %v698, %v697
        %v706 = vpack.c.bf16 %v699, %v699
        %v707 = vld [vmem:[%s5] sm:$0xf]
        %v708 = vld [vmem:[%s5 + $0x4] sm:$0xf]
        %v709 = vld [vmem:[%s5 + $0x8] sm:$0xf]
        %v710 = vld [vmem:[%s5 + $0xc] sm:$0xf]
        %v711 = vld [vmem:[%s5 + $0x10] sm:$0xf]
        %v712 = vld [vmem:[%s5 + $0x14] sm:$0xf]
        %v713 = vld [vmem:[%s5 + $0x18] sm:$0xf]
        %v714 = vld [vmem:[%s5 + $0x1c] sm:$0xf]
        %v715 = vld [vmem:[%s5 + $0x20] sm:$0xf]
        %v716 = vld [vmem:[%s5 + $0x24] sm:$0xf]
        %v717 = vld [vmem:[%s5 + $0x28] sm:$0xf]
        %v718 = vld [vmem:[%s5 + $0x2c] sm:$0xf]
        %v719 = vld [vmem:[%s5 + $0x30] sm:$0xf]
        %v720 = vld [vmem:[%s5 + $0x34] sm:$0xf]
        %v721 = vld [vmem:[%s5 + $0x38] sm:$0xf]
        %v722 = vld [vmem:[%s5 + $0x3c] sm:$0xf]
        %v723 = vld [vmem:[%s6] sm:$0x1]
        %v725 = vlaneseq
        %v726 = vshrl.u32 %v725, 7
        %v727 = vsub.s32 0, %v726
        %v728 = vrot.slane %v723, %v727
        %v746 = vunpack.c.l.b16 %v707
        %v747 = vunpack.c.l.b16 %v708
        %v748 = vunpack.c.l.b16 %v709
        %v749 = vunpack.c.l.b16 %v710
        %v750 = vunpack.c.l.b16 %v711
        %v751 = vunpack.c.l.b16 %v712
        %v752 = vunpack.c.l.b16 %v713
        %v753 = vunpack.c.l.b16 %v714
        %v754 = vunpack.c.l.b16 %v715
        %v755 = vunpack.c.l.b16 %v716
        %v756 = vunpack.c.l.b16 %v717
        %v757 = vunpack.c.l.b16 %v718
        %v758 = vunpack.c.l.b16 %v719
        %v759 = vunpack.c.l.b16 %v720
        %v760 = vunpack.c.l.b16 %v721
        %v761 = vunpack.c.l.b16 %v722
        %v762 = vpack.c.b16 %v747, %v746
        %v763 = vpack.c.b16 %v749, %v748
        %v764 = vpack.c.b16 %v751, %v750
        %v765 = vpack.c.b16 %v753, %v752
        %v766 = vpack.c.b16 %v755, %v754
        %v767 = vpack.c.b16 %v757, %v756
        %v768 = vpack.c.b16 %v759, %v758
        %v769 = vpack.c.b16 %v761, %v760
        %778 = vmatprep.subr.bf16.mxu0 0
        %779 = vmatpush1.bf16.msra.mxu0 %v762
        %780 = vmatprep.subr.bf16.mxu0 0
        %781 = vmatpush1.bf16.msra.mxu0 %v763
        %782 = vmatprep.subr.bf16.mxu0 0
        %783 = vmatpush1.bf16.msra.mxu0 %v764
        %784 = vmatprep.subr.bf16.mxu0 0
        %785 = vmatpush1.bf16.msra.mxu0 %v765
        %786 = vmatprep.subr.bf16.mxu0 0
        %787 = vmatpush1.bf16.msra.mxu0 %v766
        %788 = vmatprep.subr.bf16.mxu0 0
        %789 = vmatpush1.bf16.msra.mxu0 %v767
        %790 = vmatprep.subr.bf16.mxu0 0
        %791 = vmatpush1.bf16.msra.mxu0 %v768
        %792 = vmatprep.subr.bf16.mxu0 0
        %793 = vmatpush1.bf16.msra.mxu0 %v769
        %794 = vmatprep.subr.bf16.mxu0 0
        %795 = vmatpush1.bf16.msra.mxu0 0
        %796 = vmatprep.subr.bf16.mxu0 0
        %797 = vmatpush1.bf16.msra.mxu0 0
        %798 = vmatprep.subr.bf16.mxu0 0
        %799 = vmatpush1.bf16.msra.mxu0 0
        %800 = vmatprep.subr.bf16.mxu0 0
        %801 = vmatpush1.bf16.msra.mxu0 0
        %802 = vmatprep.subr.bf16.mxu0 0
        %803 = vmatpush1.bf16.msra.mxu0 0
        %804 = vmatprep.subr.bf16.mxu0 0
        %805 = vmatpush1.bf16.msra.mxu0 0
        %806 = vmatprep.subr.bf16.mxu0 0
        %807 = vmatpush1.bf16.msra.mxu0 0
        %808 = vmatprep.subr.bf16.mxu0 0
        %809 = vmatpush1.bf16.msra.mxu0 0
        %810 = vmatprep.mubr.bf16.mxu0 0
        %811 = vmatmul.mubr.bf16.gmra.mrb[0].mxu0 %v700
        %v812 = vpop.f32.mrb[0].mxu0
        %v813 = vadd.f32 %v728, %v812
        %v814 = vpop.f32.mrb[0].mxu0
        %v815 = vpop.f32.mrb[0].mxu0
        %v816 = vadd.f32 %v728, %v815
        %v817 = vpop.f32.mrb[0].mxu0
        %818 = vmatprep.mubr.bf16.mxu0 0
        %819 = vmatmul.mubr.bf16.gmra.mrb[0].mxu0 %v701
        %v820 = vpop.f32.mrb[0].mxu0
        %v821 = vadd.f32 %v728, %v820
        %v822 = vpop.f32.mrb[0].mxu0
        %v823 = vpop.f32.mrb[0].mxu0
        %v824 = vadd.f32 %v728, %v823
        %v825 = vpop.f32.mrb[0].mxu0
        %826 = vmatprep.mubr.bf16.mxu0 0
        %827 = vmatmul.mubr.bf16.gmra.mrb[0].mxu0 %v702
        %v828 = vpop.f32.mrb[0].mxu0
        %v829 = vadd.f32 %v728, %v828
        %v830 = vpop.f32.mrb[0].mxu0
        %v831 = vpop.f32.mrb[0].mxu0
        %v832 = vadd.f32 %v728, %v831
        %v833 = vpop.f32.mrb[0].mxu0
        %834 = vmatprep.mubr.bf16.mxu0 0
        %835 = vmatmul.mubr.bf16.gmra.mrb[0].mxu0 %v703
        %v836 = vpop.f32.mrb[0].mxu0
        %v837 = vadd.f32 %v728, %v836
        %v838 = vpop.f32.mrb[0].mxu0
        %v839 = vpop.f32.mrb[0].mxu0
        %v840 = vadd.f32 %v728, %v839
        %v841 = vpop.f32.mrb[0].mxu0
        %842 = vmatprep.mubr.bf16.mxu0 0
        %843 = vmatmul.mubr.bf16.gmra.mrb[0].mxu0 %v704
        %v844 = vpop.f32.mrb[0].mxu0
        %v845 = vadd.f32 %v728, %v844
        %v846 = vpop.f32.mrb[0].mxu0
        %v847 = vpop.f32.mrb[0].mxu0
        %v848 = vadd.f32 %v728, %v847
        %v849 = vpop.f32.mrb[0].mxu0
        %850 = vmatprep.mubr.bf16.mxu0 0
        %851 = vmatmul.mubr.bf16.gmra.mrb[0].mxu0 %v705
        %v852 = vpop.f32.mrb[0].mxu0
        %v853 = vadd.f32 %v728, %v852
        %v854 = vpop.f32.mrb[0].mxu0
        %v855 = vpop.f32.mrb[0].mxu0
        %v856 = vadd.f32 %v728, %v855
        %v857 = vpop.f32.mrb[0].mxu0
        %858 = vmatprep.mubr.bf16.mxu0 0
        %859 = vmatmul.mubr.bf16.gmra.mrb[0].mxu0 %v706
        %v860 = vpop.f32.mrb[0].mxu0
        %v861 = vadd.f32 %v728, %v860
        %v862 = vpop.f32.mrb[0].mxu0
        %v863 = vpop.f32.mrb[0].mxu0
        %v864 = vpop.f32.mrb[0].mxu0
        %865 = vdwg.mxu0
        %v866 = vmax.f32 %v813, 0.0
        %v867 = vmax.f32 %v816, 0.0
        %v868 = vmax.f32 %v821, 0.0
        %v869 = vmax.f32 %v824, 0.0
        %v870 = vmax.f32 %v829, 0.0
        %v871 = vmax.f32 %v832, 0.0
        %v872 = vmax.f32 %v837, 0.0
        %v873 = vmax.f32 %v840, 0.0
        %v874 = vmax.f32 %v845, 0.0
        %v875 = vmax.f32 %v848, 0.0
        %v876 = vmax.f32 %v853, 0.0
        %v877 = vmax.f32 %v856, 0.0
        %v878 = vmax.f32 %v861, 0.0
        %v879 = vpack.c.bf16 %v867, %v866
        %v880 = vpack.c.bf16 %v869, %v868
        %v881 = vpack.c.bf16 %v871, %v870
        %v882 = vpack.c.bf16 %v873, %v872
        %v883 = vpack.c.bf16 %v875, %v874
        %v884 = vpack.c.bf16 %v877, %v876
        %v885 = vpack.c.bf16 %v878, %v878
        %v886 = vld [vmem:[%s7] sm:$0xf]
        %v887 = vld [vmem:[%s7 + $0x4] sm:$0xf]
        %v888 = vld [vmem:[%s7 + $0x8] sm:$0xf]
        %v889 = vld [vmem:[%s7 + $0xc] sm:$0xf]
        %v890 = vld [vmem:[%s7 + $0x10] sm:$0xf]
        %v891 = vld [vmem:[%s7 + $0x14] sm:$0xf]
        %v892 = vld [vmem:[%s7 + $0x18] sm:$0xf]
        %v893 = vld [vmem:[%s7 + $0x1c] sm:$0xf]
        %v894 = vld [vmem:[%s7 + $0x20] sm:$0xf]
        %v895 = vld [vmem:[%s7 + $0x24] sm:$0xf]
        %v896 = vld [vmem:[%s7 + $0x28] sm:$0xf]
        %v897 = vld [vmem:[%s7 + $0x2c] sm:$0xf]
        %v898 = vld [vmem:[%s7 + $0x30] sm:$0xf]
        %v899 = vld [vmem:[%s7 + $0x34] sm:$0xf]
        %v900 = vld [vmem:[%s7 + $0x38] sm:$0xf]
        %v901 = vld [vmem:[%s7 + $0x3c] sm:$0xf]
        %v902 = vld [vmem:[%s8] sm:$0x1]
        %v904 = vlaneseq
        %v905 = vshrl.u32 %v904, 7
        %v906 = vsub.s32 0, %v905
        %v907 = vrot.slane %v902, %v906
        %v925 = vunpack.c.l.b16 %v886
        %v926 = vunpack.c.l.b16 %v887
        %v927 = vunpack.c.l.b16 %v888
        %v928 = vunpack.c.l.b16 %v889
        %v929 = vunpack.c.l.b16 %v890
        %v930 = vunpack.c.l.b16 %v891
        %v931 = vunpack.c.l.b16 %v892
        %v932 = vunpack.c.l.b16 %v893
        %v933 = vunpack.c.l.b16 %v894
        %v934 = vunpack.c.l.b16 %v895
        %v935 = vunpack.c.l.b16 %v896
        %v936 = vunpack.c.l.b16 %v897
        %v937 = vunpack.c.l.b16 %v898
        %v938 = vunpack.c.l.b16 %v899
        %v939 = vunpack.c.l.b16 %v900
        %v940 = vunpack.c.l.b16 %v901
        %v941 = vpack.c.b16 %v926, %v925
        %v942 = vpack.c.b16 %v928, %v927
        %v943 = vpack.c.b16 %v930, %v929
        %v944 = vpack.c.b16 %v932, %v931
        %v945 = vpack.c.b16 %v934, %v933
        %v946 = vpack.c.b16 %v936, %v935
        %v947 = vpack.c.b16 %v938, %v937
        %v948 = vpack.c.b16 %v940, %v939
        %957 = vmatprep.subr.bf16.mxu0 0
        %958 = vmatpush1.bf16.msra.mxu0 %v941
        %959 = vmatprep.subr.bf16.mxu0 0
        %960 = vmatpush1.bf16.msra.mxu0 %v942
        %961 = vmatprep.subr.bf16.mxu0 0
        %962 = vmatpush1.bf16.msra.mxu0 %v943
        %963 = vmatprep.subr.bf16.mxu0 0
        %964 = vmatpush1.bf16.msra.mxu0 %v944
        %965 = vmatprep.subr.bf16.mxu0 0
        %966 = vmatpush1.bf16.msra.mxu0 %v945
        %967 = vmatprep.subr.bf16.mxu0 0
        %968 = vmatpush1.bf16.msra.mxu0 %v946
        %969 = vmatprep.subr.bf16.mxu0 0
        %970 = vmatpush1.bf16.msra.mxu0 %v947
        %971 = vmatprep.subr.bf16.mxu0 0
        %972 = vmatpush1.bf16.msra.mxu0 %v948
        %973 = vmatprep.subr.bf16.mxu0 0
        %974 = vmatpush1.bf16.msra.mxu0 0
        %975 = vmatprep.subr.bf16.mxu0 0
        %976 = vmatpush1.bf16.msra.mxu0 0
        %977 = vmatprep.subr.bf16.mxu0 0
        %978 = vmatpush1.bf16.msra.mxu0 0
        %979 = vmatprep.subr.bf16.mxu0 0
        %980 = vmatpush1.bf16.msra.mxu0 0
        %981 = vmatprep.subr.bf16.mxu0 0
        %982 = vmatpush1.bf16.msra.mxu0 0
        %983 = vmatprep.subr.bf16.mxu0 0
        %984 = vmatpush1.bf16.msra.mxu0 0
        %985 = vmatprep.subr.bf16.mxu0 0
        %986 = vmatpush1.bf16.msra.mxu0 0
        %987 = vmatprep.subr.bf16.mxu0 0
        %988 = vmatpush1.bf16.msra.mxu0 0
        %989 = vmatprep.mubr.bf16.mxu0 0
        %990 = vmatmul.mubr.bf16.gmra.mrb[0].mxu0 %v879
        %v991 = vpop.f32.mrb[0].mxu0
        %v992 = vadd.f32 %v907, %v991
        %v993 = vpop.f32.mrb[0].mxu0
        %v994 = vpop.f32.mrb[0].mxu0
        %v995 = vadd.f32 %v907, %v994
        %v996 = vpop.f32.mrb[0].mxu0
        %997 = vmatprep.mubr.bf16.mxu0 0
        %998 = vmatmul.mubr.bf16.gmra.mrb[0].mxu0 %v880
        %v999 = vpop.f32.mrb[0].mxu0
        %v1000 = vadd.f32 %v907, %v999
        %v1001 = vpop.f32.mrb[0].mxu0
        %v1002 = vpop.f32.mrb[0].mxu0
        %v1003 = vadd.f32 %v907, %v1002
        %v1004 = vpop.f32.mrb[0].mxu0
        %1005 = vmatprep.mubr.bf16.mxu0 0
        %1006 = vmatmul.mubr.bf16.gmra.mrb[0].mxu0 %v881
        %v1007 = vpop.f32.mrb[0].mxu0
        %v1008 = vadd.f32 %v907, %v1007
        %v1009 = vpop.f32.mrb[0].mxu0
        %v1010 = vpop.f32.mrb[0].mxu0
        %v1011 = vadd.f32 %v907, %v1010
        %v1012 = vpop.f32.mrb[0].mxu0
        %1013 = vmatprep.mubr.bf16.mxu0 0
        %1014 = vmatmul.mubr.bf16.gmra.mrb[0].mxu0 %v882
        %v1015 = vpop.f32.mrb[0].mxu0
        %v1016 = vadd.f32 %v907, %v1015
        %v1017 = vpop.f32.mrb[0].mxu0
        %v1018 = vpop.f32.mrb[0].mxu0
        %v1019 = vadd.f32 %v907, %v1018
        %v1020 = vpop.f32.mrb[0].mxu0
        %1021 = vmatprep.mubr.bf16.mxu0 0
        %1022 = vmatmul.mubr.bf16.gmra.mrb[0].mxu0 %v883
        %v1023 = vpop.f32.mrb[0].mxu0
        %v1024 = vadd.f32 %v907, %v1023
        %v1025 = vpop.f32.mrb[0].mxu0
        %v1026 = vpop.f32.mrb[0].mxu0
        %v1027 = vadd.f32 %v907, %v1026
        %v1028 = vpop.f32.mrb[0].mxu0
        %1029 = vmatprep.mubr.bf16.mxu0 0
        %1030 = vmatmul.mubr.bf16.gmra.mrb[0].mxu0 %v884
        %v1031 = vpop.f32.mrb[0].mxu0
        %v1032 = vadd.f32 %v907, %v1031
        %v1033 = vpop.f32.mrb[0].mxu0
        %v1034 = vpop.f32.mrb[0].mxu0
        %v1035 = vadd.f32 %v907, %v1034
        %v1036 = vpop.f32.mrb[0].mxu0
        %1037 = vmatprep.mubr.bf16.mxu0 0
        %1038 = vmatmul.mubr.bf16.gmra.mrb[0].mxu0 %v885
        %v1039 = vpop.f32.mrb[0].mxu0
        %v1040 = vadd.f32 %v907, %v1039
        %v1041 = vpop.f32.mrb[0].mxu0
        %v1042 = vpop.f32.mrb[0].mxu0
        %v1043 = vpop.f32.mrb[0].mxu0
        %1044 = vdwg.mxu0
        %vm1045 = vcmask 64512
        %1046 = vst.msk [vmem:[%s334] sm:$0xff] %vm1045, %v992
        %1047 = vst.msk [vmem:[%s334 + $0x8] sm:$0xff] %vm1045, %v995
        %1048 = vst.msk [vmem:[%s334 + $0x10] sm:$0xff] %vm1045, %v1000
        %1049 = vst.msk [vmem:[%s334 + $0x18] sm:$0xff] %vm1045, %v1003
        %1050 = vst.msk [vmem:[%s334 + $0x20] sm:$0xff] %vm1045, %v1008
        %1051 = vst.msk [vmem:[%s334 + $0x28] sm:$0xff] %vm1045, %v1011
        %1052 = vst.msk [vmem:[%s334 + $0x30] sm:$0xff] %vm1045, %v1016
        %1053 = vst.msk [vmem:[%s334 + $0x38] sm:$0xff] %vm1045, %v1019
        %1054 = vst.msk [vmem:[%s334 + $0x40] sm:$0xff] %vm1045, %v1024
        %1055 = vst.msk [vmem:[%s334 + $0x48] sm:$0xff] %vm1045, %v1027
        %1056 = vst.msk [vmem:[%s334 + $0x50] sm:$0xff] %vm1045, %v1032
        %1057 = vst.msk [vmem:[%s334 + $0x58] sm:$0xff] %vm1045, %v1035
        %1058 = vst.msk [vmem:[%s334 + $0x60] sm:$0xff] %vm1045, %v1040
        %s1059 = sand.u32 %s222, 1
        %s1060 = sand.u32 %s222, 1
        %s1061 = smul.addr %s1060, 104
        %s1062 = scalar_lea.vmem [#allocation2], %s1061
        // Predicated region
        $region57: #{qmodel_forward.1} parent=55 // pred_check
          %p1063 = pneg %p232
        $region58: #{qmodel_forward.1} parent=55 // pred_check_branch
          %1065 = sbr.rel (%p1063) target = $region60
        $region59: #{qmodel_forward.1} parent=55 // pred_region
          %s1066 = smul.u32 13, %s20
          %s1067 = ssub.s32 25, %s1066
          %p1068 = scmp.lt.s32.totalorder %s1067, 13
          %s1069 = scalar_select %p1068, %s1067, 13
          %s1070 = smul.u32 128, %s1069
          %p1071 = scmp.ne.s32.totalorder 0, %s1070
          %s1072 = smul.addr %s1066, 8
          %s1073 = scalar_lea.vmem %s9, %s1072
          // Predicated region
          $region61: #{qmodel_forward.1} parent=59 // pred_check
            %p1074 = pneg %p1071
          $region62: #{qmodel_forward.1} parent=59 // pred_check_branch
            %1076 = sbr.rel (%p1074) target = $region64
          $region63: #{qmodel_forward.1} parent=59 // pred_region
            // Predicated region
            $region65: #{qmodel_forward.1} parent=63 // pred_check
              _
            $region66: #{qmodel_forward.1} parent=63 // pred_check_branch
              %1078 = sbr.rel (0) target = $region68
            $region67: #{qmodel_forward.1} parent=63 // pred_region
              // Predicated region
              $region87: #{qmodel_forward.1} parent=67 // pred_check
                _
              $region88: #{qmodel_forward.1} parent=67 // pred_check_branch
                %1152 = sbr.rel (0) target = $region90
              $region89: #{qmodel_forward.1} parent=67 // pred_region
                %s1153 = sdiv.u32.pop %s1069, 13
                %s1154 = srem.u32.pop %s1069, 13
                // While loop
                $region91: #{qmodel_forward.1} parent=89 // loop_pre_header
                  _
                $region92: #{qmodel_forward.1} parent=89 // loop_header
                  %s1156 = sphi 0, %s1158
                  %p1157 = scmp.ge.s32.totalorder %s1156, %s1153
                  %s1161 = sphi 0, %s1192
                  %s1162 = sphi %s1062, %s1195
                  %s1163 = sphi %s1073, %s1196
                $region93: #{qmodel_forward.1} parent=89 // loop_header_branch
                  %1160 = sbr.rel (%p1157) target = $region97
                $region94: #{qmodel_forward.1} parent=89 // loop_body
                  %v1164 = vld [vmem:[%s1162] sm:$0xff]
                  %1165 = vst [vmem:[%s1163] sm:$0xff] %v1164
                  %v1166 = vld [vmem:[%s1162 + $0x8] sm:$0xff]
                  %1167 = vst [vmem:[%s1163 + $0x8] sm:$0xff] %v1166
                  %v1168 = vld [vmem:[%s1162 + $0x10] sm:$0xff]
                  %1169 = vst [vmem:[%s1163 + $0x10] sm:$0xff] %v1168
                  %v1170 = vld [vmem:[%s1162 + $0x18] sm:$0xff]
                  %1171 = vst [vmem:[%s1163 + $0x18] sm:$0xff] %v1170
                  %v1172 = vld [vmem:[%s1162 + $0x20] sm:$0xff]
                  %1173 = vst [vmem:[%s1163 + $0x20] sm:$0xff] %v1172
                  %v1174 = vld [vmem:[%s1162 + $0x28] sm:$0xff]
                  %1175 = vst [vmem:[%s1163 + $0x28] sm:$0xff] %v1174
                  %v1176 = vld [vmem:[%s1162 + $0x30] sm:$0xff]
                  %1177 = vst [vmem:[%s1163 + $0x30] sm:$0xff] %v1176
                  %v1178 = vld [vmem:[%s1162 + $0x38] sm:$0xff]
                  %1179 = vst [vmem:[%s1163 + $0x38] sm:$0xff] %v1178
                  %v1180 = vld [vmem:[%s1162 + $0x40] sm:$0xff]
                  %1181 = vst [vmem:[%s1163 + $0x40] sm:$0xff] %v1180
                  %v1182 = vld [vmem:[%s1162 + $0x48] sm:$0xff]
                  %1183 = vst [vmem:[%s1163 + $0x48] sm:$0xff] %v1182
                  %v1184 = vld [vmem:[%s1162 + $0x50] sm:$0xff]
                  %1185 = vst [vmem:[%s1163 + $0x50] sm:$0xff] %v1184
                  %v1186 = vld [vmem:[%s1162 + $0x58] sm:$0xff]
                  %1187 = vst [vmem:[%s1163 + $0x58] sm:$0xff] %v1186
                  %v1188 = vld [vmem:[%s1162 + $0x60] sm:$0xff]
                  %1189 = vst [vmem:[%s1163 + $0x60] sm:$0xff] %v1188
                  %s1190 = sadd.s32 1, %s1161
                  %p1191 = scmp.ge.s32.totalorder %s1190, %s1153
                  %s1192 = scalar_select %p1191, 0, %s1190
                  %s1193 = smul.u32 %s1192, 104
                  %s1194 = smul.u32 %s1192, 104
                  %s1195 = scalar_lea.vmem %s1062, %s1193 [#allocation2]
                  %s1196 = scalar_lea.vmem %s1073, %s1194
                $region95: #{qmodel_forward.1} parent=89 // loop_footer
                  %s1158 = sadd.s32 %s1156, 1
                $region96: #{qmodel_forward.1} parent=89 // loop_footer_branch
                  %1155 = sbr.rel target = $region92
                $region97: #{qmodel_forward.1} parent=89 // loop_exit
                  _
                %s1197 = sdiv.u32.pop %s1069, 13
                %s1198 = srem.u32.pop %s1069, 13
                %s1199 = smul.u32 %s1197, 13
                %s1200 = smul.u32 8, %s1199
                %s1201 = scalar_lea.vmem %s1062, %s1200 [#allocation2]
                %s1202 = smul.u32 8, %s1199
                %s1203 = scalar_lea.vmem %s1073, %s1202
                // While loop
                $region98: #{qmodel_forward.1} parent=89 // loop_pre_header
                  _
                $region99: #{qmodel_forward.1} parent=89 // loop_header
                  %s1205 = sphi 0, %s1207
                  %p1206 = scmp.ge.s32.totalorder %s1205, %s1198
                  %s1210 = sphi 0, %s1217
                  %s1211 = sphi %s1201, %s1220
                  %s1212 = sphi %s1203, %s1221
                $region100: #{qmodel_forward.1} parent=89 // loop_header_branch
                  %1209 = sbr.rel (%p1206) target = $region104
                $region101: #{qmodel_forward.1} parent=89 // loop_body
                  %v1213 = vld [vmem:[%s1211] sm:$0xff]
                  %1214 = vst [vmem:[%s1212] sm:$0xff] %v1213
                  %s1215 = sadd.s32 1, %s1210
                  %p1216 = scmp.ge.s32.totalorder %s1215, %s1198
                  %s1217 = scalar_select %p1216, 0, %s1215
                  %s1218 = smul.u32 %s1217, 8
                  %s1219 = smul.u32 %s1217, 8
                  %s1220 = scalar_lea.vmem %s1201, %s1218 [#allocation2]
                  %s1221 = scalar_lea.vmem %s1203, %s1219
                $region102: #{qmodel_forward.1} parent=89 // loop_footer
                  %s1207 = sadd.s32 %s1205, 1
                $region103: #{qmodel_forward.1} parent=89 // loop_footer_branch
                  %1204 = sbr.rel target = $region99
                $region104: #{qmodel_forward.1} parent=89 // loop_exit
                  _
              $region90: #{qmodel_forward.1} parent=67 // pred_fallthru
                _
              // Predicated region
              $region105: #{qmodel_forward.1} parent=67 // pred_check
                _
              $region106: #{qmodel_forward.1} parent=67 // pred_check_branch
                %1223 = sbr.rel target = $region108
              $region107: #{qmodel_forward.1} parent=67 // pred_region
                _
              $region108: #{qmodel_forward.1} parent=67 // pred_fallthru
                _
            $region68: #{qmodel_forward.1} parent=63 // pred_fallthru
              _
            // Predicated region
            $region69: #{qmodel_forward.1} parent=63 // pred_check
              _
            $region70: #{qmodel_forward.1} parent=63 // pred_check_branch
              %1080 = sbr.rel target = $region72
            $region71: #{qmodel_forward.1} parent=63 // pred_region
              %s1082 = sdiv.u32.pop %s1069, 13
              %s1083 = srem.u32.pop %s1069, 13
              // While loop
              $region73: #{qmodel_forward.1} parent=71 // loop_pre_header
                _
              $region74: #{qmodel_forward.1} parent=71 // loop_header
                %s1085 = sphi 0, %s1087
                %p1086 = scmp.ge.s32.totalorder %s1085, %s1082
                %s1090 = sphi 0, %s1121
                %s1091 = sphi %s1062, %s1124
                %s1092 = sphi %s1073, %s1125
              $region75: #{qmodel_forward.1} parent=71 // loop_header_branch
                %1089 = sbr.rel (%p1086) target = $region79
              $region76: #{qmodel_forward.1} parent=71 // loop_body
                %v1093 = vld [vmem:[%s1091] sm:$0xff]
                %1094 = vst [vmem:[%s1092] sm:$0xff] %v1093
                %v1095 = vld [vmem:[%s1091 + $0x8] sm:$0xff]
                %1096 = vst [vmem:[%s1092 + $0x8] sm:$0xff] %v1095
                %v1097 = vld [vmem:[%s1091 + $0x10] sm:$0xff]
                %1098 = vst [vmem:[%s1092 + $0x10] sm:$0xff] %v1097
                %v1099 = vld [vmem:[%s1091 + $0x18] sm:$0xff]
                %1100 = vst [vmem:[%s1092 + $0x18] sm:$0xff] %v1099
                %v1101 = vld [vmem:[%s1091 + $0x20] sm:$0xff]
                %1102 = vst [vmem:[%s1092 + $0x20] sm:$0xff] %v1101
                %v1103 = vld [vmem:[%s1091 + $0x28] sm:$0xff]
                %1104 = vst [vmem:[%s1092 + $0x28] sm:$0xff] %v1103
                %v1105 = vld [vmem:[%s1091 + $0x30] sm:$0xff]
                %1106 = vst [vmem:[%s1092 + $0x30] sm:$0xff] %v1105
                %v1107 = vld [vmem:[%s1091 + $0x38] sm:$0xff]
                %1108 = vst [vmem:[%s1092 + $0x38] sm:$0xff] %v1107
                %v1109 = vld [vmem:[%s1091 + $0x40] sm:$0xff]
                %1110 = vst [vmem:[%s1092 + $0x40] sm:$0xff] %v1109
                %v1111 = vld [vmem:[%s1091 + $0x48] sm:$0xff]
                %1112 = vst [vmem:[%s1092 + $0x48] sm:$0xff] %v1111
                %v1113 = vld [vmem:[%s1091 + $0x50] sm:$0xff]
                %1114 = vst [vmem:[%s1092 + $0x50] sm:$0xff] %v1113
                %v1115 = vld [vmem:[%s1091 + $0x58] sm:$0xff]
                %1116 = vst [vmem:[%s1092 + $0x58] sm:$0xff] %v1115
                %v1117 = vld [vmem:[%s1091 + $0x60] sm:$0xff]
                %1118 = vst [vmem:[%s1092 + $0x60] sm:$0xff] %v1117
                %s1119 = sadd.s32 1, %s1090
                %p1120 = scmp.ge.s32.totalorder %s1119, %s1082
                %s1121 = scalar_select %p1120, 0, %s1119
                %s1122 = smul.u32 %s1121, 104
                %s1123 = smul.u32 %s1121, 104
                %s1124 = scalar_lea.vmem %s1062, %s1122 [#allocation2]
                %s1125 = scalar_lea.vmem %s1073, %s1123
              $region77: #{qmodel_forward.1} parent=71 // loop_footer
                %s1087 = sadd.s32 %s1085, 1
              $region78: #{qmodel_forward.1} parent=71 // loop_footer_branch
                %1084 = sbr.rel target = $region74
              $region79: #{qmodel_forward.1} parent=71 // loop_exit
                _
              %s1126 = sdiv.u32.pop %s1069, 13
              %s1127 = srem.u32.pop %s1069, 13
              %s1128 = smul.u32 %s1126, 13
              %s1129 = smul.u32 8, %s1128
              %s1130 = scalar_lea.vmem %s1062, %s1129 [#allocation2]
              %s1131 = smul.u32 8, %s1128
              %s1132 = scalar_lea.vmem %s1073, %s1131
              // While loop
              $region80: #{qmodel_forward.1} parent=71 // loop_pre_header
                _
              $region81: #{qmodel_forward.1} parent=71 // loop_header
                %s1134 = sphi 0, %s1136
                %p1135 = scmp.ge.s32.totalorder %s1134, %s1127
                %s1139 = sphi 0, %s1146
                %s1140 = sphi %s1130, %s1149
                %s1141 = sphi %s1132, %s1150
              $region82: #{qmodel_forward.1} parent=71 // loop_header_branch
                %1138 = sbr.rel (%p1135) target = $region86
              $region83: #{qmodel_forward.1} parent=71 // loop_body
                %v1142 = vld [vmem:[%s1140] sm:$0xff]
                %1143 = vst [vmem:[%s1141] sm:$0xff] %v1142
                %s1144 = sadd.s32 1, %s1139
                %p1145 = scmp.ge.s32.totalorder %s1144, %s1127
                %s1146 = scalar_select %p1145, 0, %s1144
                %s1147 = smul.u32 %s1146, 8
                %s1148 = smul.u32 %s1146, 8
                %s1149 = scalar_lea.vmem %s1130, %s1147 [#allocation2]
                %s1150 = scalar_lea.vmem %s1132, %s1148
              $region84: #{qmodel_forward.1} parent=71 // loop_footer
                %s1136 = sadd.s32 %s1134, 1
              $region85: #{qmodel_forward.1} parent=71 // loop_footer_branch
                %1133 = sbr.rel target = $region81
              $region86: #{qmodel_forward.1} parent=71 // loop_exit
                _
            $region72: #{qmodel_forward.1} parent=63 // pred_fallthru
              _
          $region64: #{qmodel_forward.1} parent=59 // pred_fallthru
            _
          %1224 = vnop
        $region60: #{qmodel_forward.1} parent=55 // pred_fallthru
          _
      $region56: #{qmodel_forward.1} parent=5 // pred_fallthru
        _
      %p1225 = scmp.le.s32.totalorder 2, %s15
      // Predicated region
      $region109: #{qmodel_forward.1} parent=5 // pred_check
        %p1226 = pneg %p1225
      $region110: #{qmodel_forward.1} parent=5 // pred_check_branch
        %1228 = sbr.rel (%p1226) target = $region112
      $region111: #{qmodel_forward.1} parent=5 // pred_region
        %s1229 = ssub.s32 %s15, 2
        // Predicated region
        $region113: #{qmodel_forward.1} parent=111 // pred_check
          %p1230 = pneg %p238
        $region114: #{qmodel_forward.1} parent=111 // pred_check_branch
          %1232 = sbr.rel (%p1230) target = $region116
        $region115: #{qmodel_forward.1} parent=111 // pred_region
          %s1233 = sand.u32 %s223, 1
          %s1234 = sand.u32 %s223, 1
          %s1235 = smul.addr %s1234, 104
          %s1236 = scalar_lea.vmem [#allocation2], %s1235
        $region116: #{qmodel_forward.1} parent=111 // pred_fallthru
          _
      $region112: #{qmodel_forward.1} parent=5 // pred_fallthru
        _
    $region6: #{qmodel_forward.1} parent=1 // loop_footer
      %s19 = sadd.s32 1, %s15
    $region7: #{qmodel_forward.1} parent=1 // loop_footer_branch
      %14 = sbr.rel target = $region3
    $region8: #{qmodel_forward.1} parent=1 // loop_exit
      _

</llo_original>
